<compile_context>
chip_gen: v7x
topology: tpu7x:2x2x1
jax: 0.10.0
libtpu: 0.0.40
codegen_flags: <defaults>
</compile_context>

<pallas_src>
import math

import jax
import jax.numpy as jnp
from jax import lax
from jax.experimental import pallas as pl
from jax.experimental.pallas import tpu as pltpu


_INV_SQRT2 = 1.0 / math.sqrt(2.0)


def _gelu_exact(x):
    # PyTorch F.gelu default = exact erf formulation, computed in f32.
    return 0.5 * x * (1.0 + lax.erf(x * _INV_SQRT2))


def ffn_kernel(x_ref, w1v_ref, b1v_ref, w1g_ref, b1g_ref, w2_ref, b2_ref,
               o_ref, acc_ref):
    # Grid: (i over token tiles [parallel], j over hidden blocks [arbitrary/reduction]).
    j = pl.program_id(1)

    @pl.when(j == 0)
    def _():
        acc_ref[...] = jnp.zeros_like(acc_ref)

    x = x_ref[...]
    # Value / gate halves of the first linear, one hidden block at a time (MXU, f32 acc).
    val = jnp.dot(x, w1v_ref[...], preferred_element_type=jnp.float32) + b1v_ref[...]
    gates = jnp.dot(x, w1g_ref[...], preferred_element_type=jnp.float32) + b1g_ref[...]

    # GEGLU in f32 (exact erf for parity with PyTorch F.gelu); Dropout(p=0.0) is identity.
    u = val * _gelu_exact(gates)

    acc_ref[...] += jnp.dot(u.astype(w2_ref.dtype), w2_ref[...],
                            preferred_element_type=jnp.float32)

    @pl.when(j == pl.num_programs(1) - 1)
    def _():
        o_ref[...] = (acc_ref[...] + b2_ref[...]).astype(o_ref.dtype)


def _round_up(v, m):
    return ((v + m - 1) // m) * m


def _tpu_generation_and_vmem():
    """Best-effort TPU generation + VMEM capacity; safe fallbacks off-device."""
    gen = 6
    vmem_cap = 128 << 20
    try:
        vmem_cap = int(pltpu.get_tpu_info().vmem_capacity_bytes)
    except Exception:
        pass
    try:
        kind = jax.devices()[0].device_kind.lower()
        for g in (7, 6, 5, 4):
            if (f"v{g}" in kind) or (f"tpu{g}" in kind):
                gen = g
                break
    except Exception:
        pass
    return gen, vmem_cap


def _pick_tn(hidden, target, lane_mult):
    """Largest multiple of lane_mult (then 128) dividing hidden, <= target."""
    for mult in (lane_mult, 128):
        best = None
        t = mult
        while t <= min(hidden, max(target, mult)):
            if hidden % t == 0 and t <= target:
                best = t
            t += mult
        if best is not None:
            return best
    # TODO(synk): pad the hidden dimension when it is not 128-lane aligned.
    return hidden


def feed_forward(x, w1, b1, w2, b2, *, tm=None, tn=None):
    """x: (B, N, dim). w1: (dim, 2*hidden), b1: (2*hidden,), w2: (hidden, dim), b2: (dim,)."""
    B, N, dim = x.shape
    hidden = w2.shape[0]
    assert w1.shape == (dim, 2 * hidden)
    assert b1.shape == (2 * hidden,)
    assert b2.shape == (dim,)

    gen, vmem_cap = _tpu_generation_and_vmem()

    # Per-generation tile targets and scoped-VMEM ceilings.
    if gen >= 7:      # v7x: 3.2 TB/s HBM, 64 MiB VMEM/TC, 2 TCs -> modest tiles, headroom
        tm_tgt, tn_tgt, lane_mult = 256, 256, 256
        vmem_ceiling = min(vmem_cap, 56 << 20)
    elif gen == 6:    # v6e: ~650 FLOP/B balance point, 128 MiB VMEM -> big tiles
        tm_tgt, tn_tgt, lane_mult = 512, 512, 256
        vmem_ceiling = min(vmem_cap, 100 << 20)
    else:             # v5e and older: ~240 FLOP/B balance, 128^2 MXU
        tm_tgt, tn_tgt, lane_mult = 256, 256, 128
        vmem_ceiling = min(vmem_cap, 100 << 20)
    if tm is not None:
        tm_tgt = tm
    if tn is not None:
        tn_tgt = tn

    M = B * N
    x2d = x.reshape(M, dim)

    # Row tile: multiple of 8 sublanes; no wrapper-side padding (Pallas masks the ragged
    # last block; the math is row-independent so garbage OOB rows are dropped on write).
    tm = max(8, (min(tm_tgt, _round_up(M, 8)) // 8) * 8)
    # Keep the leading "parallel" grid axis >= 2 blocks on multi-TensorCore chips (v7x).
    if gen >= 7 and pl.cdiv(M, tm) < 2 and M > 8:
        tm = max(8, _round_up((M + 1) // 2, 8))

    # Hidden block: lane/MXU-aligned divisor of hidden (never the full (hidden, dim) W2).
    tn = _pick_tn(hidden, tn_tgt, lane_mult)

    isz_x = jnp.dtype(x.dtype).itemsize
    isz_w = jnp.dtype(w1.dtype).itemsize

    def vmem_bytes(tm_, tn_):
        return (2 * tm_ * dim * isz_x            # x tile (double-buffered)
                + 2 * 2 * dim * tn_ * isz_w      # W1 value + gate blocks
                + 2 * 2 * tn_ * isz_w            # b1 value + gate blocks
                + 2 * tn_ * dim * isz_w          # W2 block
                + 2 * dim * isz_w                # b2
                + 2 * tm_ * dim * isz_x          # out tile
                + tm_ * dim * 4                  # f32 accumulator scratch
                + 3 * tm_ * tn_ * 4)             # f32 temporaries (val, gates, u)

    headroom = 4 << 20
    # Shrink tiles until the real budget (incl. temporaries) fits the per-generation cap.
    for _ in range(16):
        if vmem_bytes(tm, tn) + headroom <= vmem_ceiling:
            break
        if tn > lane_mult:
            tn = _pick_tn(hidden, max(lane_mult, tn // 2), lane_mult)
        elif tm > 8:
            tm = max(8, ((tm // 2) // 8) * 8)
        else:
            break

    n_mblk = pl.cdiv(M, tm)
    n_hblk = hidden // tn
    gate_off = n_hblk  # gate half of W1/b1 starts at column-block index n_hblk

    vmem_limit = int(min(max(vmem_bytes(tm, tn) + headroom, 32 << 20), vmem_ceiling))

    b1_2d = b1.reshape(1, 2 * hidden)
    b2_2d = b2.reshape(1, dim)

    # Truthful cost estimate: streamed weights are re-read once per token tile.
    cost = pl.CostEstimate(
        flops=int(6 * M * dim * hidden),          # 4*M*dim*hidden (lin1) + 2*M*hidden*dim (lin2)
        transcendentals=int(M * hidden),          # erf in GEGLU
        bytes_accessed=int(2 * M * dim * isz_x    # x read + out write
                           + n_mblk * (w1.size + b1.size + w2.size + b2.size) * isz_w))

    out2d = pl.pallas_call(
        ffn_kernel,
        out_shape=jax.ShapeDtypeStruct((M, dim), x.dtype),
        grid_spec=pltpu.PrefetchScalarGridSpec(
            num_scalar_prefetch=0,
            grid=(n_mblk, n_hblk),
            in_specs=[
                pl.BlockSpec((tm, dim), lambda i, j: (i, 0)),              # x tile
                pl.BlockSpec((dim, tn), lambda i, j: (0, j)),              # W1 value block
                pl.BlockSpec((1, tn),   lambda i, j: (0, j)),              # b1 value block
                pl.BlockSpec((dim, tn), lambda i, j: (0, j + gate_off)),   # W1 gate block
                pl.BlockSpec((1, tn),   lambda i, j: (0, j + gate_off)),   # b1 gate block
                pl.BlockSpec((tn, dim), lambda i, j: (j, 0)),              # W2 block
                pl.BlockSpec((1, dim),  lambda i, j: (0, 0)),              # b2
            ],
            out_specs=pl.BlockSpec((tm, dim), lambda i, j: (i, 0)),
            scratch_shapes=[pltpu.VMEM((tm, dim), jnp.float32)],
        ),
        compiler_params=pltpu.CompilerParams(
            dimension_semantics=("parallel", "arbitrary"),
            vmem_limit_bytes=vmem_limit),
        cost_estimate=cost,
    )(x2d, w1, b1_2d, w1, b1_2d, w2, b2_2d)   # w1/b1 passed twice: same HBM buffer, no copy

    return out2d.reshape(B, N, dim)


def feed_forward_ref(x, w1, b1, w2, b2):
    h = jnp.einsum("bnd,dh->bnh", x, w1) + b1
    hidden = w2.shape[0]
    val, gates = h[..., :hidden], h[..., hidden:]
    u = val * (0.5 * gates * (1.0 + lax.erf(gates / jnp.sqrt(2.0))))
    return jnp.einsum("bnh,hd->bnd", u, w2) + b2


if __name__ == "__main__":
    # Small but lane-dense shapes (dim multiple of 128), mult=4 as in the module.
    B, N, dim, mult = 2, 8, 128, 4
    hidden = dim * mult  # 512

    key = jax.random.PRNGKey(0)
    kx, k1, kb1, k2, kb2 = jax.random.split(key, 5)

    x = jax.random.normal(kx, (B, N, dim), dtype=jnp.float32)

    # Deterministic parameter init (uniform, roughly matching nn.Linear scale).
    lim1 = 1.0 / math.sqrt(dim)
    lim2 = 1.0 / math.sqrt(hidden)
    w1 = jax.random.uniform(k1, (dim, 2 * hidden), jnp.float32, -lim1, lim1)
    b1 = jax.random.uniform(kb1, (2 * hidden,), jnp.float32, -lim1, lim1)
    w2 = jax.random.uniform(k2, (hidden, dim), jnp.float32, -lim2, lim2)
    b2 = jax.random.uniform(kb2, (dim,), jnp.float32, -lim2, lim2)

    ref = feed_forward_ref(x, w1, b1, w2, b2)

    # f32 path (tight check vs reference).
    out = jax.block_until_ready(feed_forward(x, w1, b1, w2, b2))
    assert out.shape == (B, N, dim)
    assert jnp.allclose(out, ref, atol=1e-4, rtol=1e-4)

    # bf16 operand / f32-accumulate path (production config for v6e/v7x MXU peak).
    out_bf16 = jax.block_until_ready(
        feed_forward(x.astype(jnp.bfloat16), w1.astype(jnp.bfloat16),
                     b1.astype(jnp.bfloat16), w2.astype(jnp.bfloat16),
                     b2.astype(jnp.bfloat16)))
    assert out_bf16.dtype == jnp.bfloat16
    assert bool(jnp.all(jnp.isfinite(out_bf16.astype(jnp.float32))))
    assert jnp.allclose(out_bf16.astype(jnp.float32), ref, atol=1e-1, rtol=1e-1)

    # Ragged-M path (exercises the un-padded last row block).
    x_rag = x[:, :5, :]
    ref_rag = feed_forward_ref(x_rag, w1, b1, w2, b2)
    out_rag = jax.block_until_ready(feed_forward(x_rag, w1, b1, w2, b2))
    assert jnp.allclose(out_rag, ref_rag, atol=1e-4, rtol=1e-4)

    print("KERNEL_OK")
</pallas_src>

<mosaic_0001>
module attributes {stable_mosaic.version = 11 : i64} {
  func.func @ffn_kernel(%arg0: i32, %arg1: i32, %arg2: memref<16x128xf32, #tpu.memory_space<vmem>>, %arg3: memref<128x512xf32, #tpu.memory_space<vmem>>, %arg4: memref<1x512xf32, #tpu.memory_space<vmem>>, %arg5: memref<128x512xf32, #tpu.memory_space<vmem>>, %arg6: memref<1x512xf32, #tpu.memory_space<vmem>>, %arg7: memref<512x128xf32, #tpu.memory_space<vmem>>, %arg8: memref<1x128xf32, #tpu.memory_space<vmem>>, %arg9: memref<16x128xf32, #tpu.memory_space<vmem>>, %arg10: memref<16x128xf32, #tpu.memory_space<vmem>>) attributes {dimension_semantics = [#tpu.dimension_semantics<parallel>, #tpu.dimension_semantics<arbitrary>], iteration_bounds = array<i64: 1, 1>, scalar_prefetch = 0 : i64, scratch_operands = 1 : i64, tpu.core_type = #tpu.core_type<tc>, window_params = [{transform_indices = @transform_0, window_bounds = array<i64: 16, 128>}, {transform_indices = @transform_1, window_bounds = array<i64: 128, 512>}, {transform_indices = @transform_2, window_bounds = array<i64: 1, 512>}, {transform_indices = @transform_3, window_bounds = array<i64: 128, 512>}, {transform_indices = @transform_4, window_bounds = array<i64: 1, 512>}, {transform_indices = @transform_5, window_bounds = array<i64: 512, 128>}, {pipeline_mode = #tpu.pipeline_mode<synchronous>, transform_indices = @transform_6, window_bounds = array<i64: 1, 128>}, {transform_indices = @transform_7, window_bounds = array<i64: 16, 128>}]} {
    %c0_i32 = arith.constant 0 : i32
    %0 = arith.cmpi eq, %arg1, %c0_i32 : i32
    %1 = arith.extui %0 : i1 to i32
    %c0_i32_0 = arith.constant 0 : i32
    %2 = arith.cmpi ne, %1, %c0_i32_0 : i32
    scf.if %2 {
      %cst_23 = arith.constant 0.000000e+00 : f32
      %31 = vector.broadcast %cst_23 : f32 to vector<16x128xf32>
      %c0_24 = arith.constant 0 : index
      %c0_25 = arith.constant 0 : index
      %32 = vector.load %arg10[%c0_24, %c0_25] : memref<16x128xf32, #tpu.memory_space<vmem>>, vector<16x128xf32>
      tpu.vector_store %arg10[%c0_24, %c0_25], %31 {strides = array<i32>} : memref<16x128xf32, #tpu.memory_space<vmem>>, vector<16x128xf32>,
    } else {
    }
    %c0 = arith.constant 0 : index
    %c0_1 = arith.constant 0 : index
    %3 = vector.load %arg2[%c0, %c0_1] : memref<16x128xf32, #tpu.memory_space<vmem>>, vector<16x128xf32>
    %c0_2 = arith.constant 0 : index
    %c0_3 = arith.constant 0 : index
    %4 = vector.load %arg3[%c0_2, %c0_3] : memref<128x512xf32, #tpu.memory_space<vmem>>, vector<128x512xf32>
    %cst = arith.constant dense<0.000000e+00> : vector<16x512xf32>
    %5 = tpu.matmul %3, %4, %cst {dimension_numbers = #tpu.dot_dimension_numbers<[1], [0], [0], [1], [0, 0, 1, 1], [], []>} : vector<16x128xf32>, vector<128x512xf32>, vector<16x512xf32> -> vector<16x512xf32>
    %c0_4 = arith.constant 0 : index
    %c0_5 = arith.constant 0 : index
    %6 = vector.load %arg4[%c0_4, %c0_5] : memref<1x512xf32, #tpu.memory_space<vmem>>, vector<1x512xf32>
    %7 = vector.broadcast %6 : vector<1x512xf32> to vector<16x512xf32>
    %8 = arith.addf %5, %7 : vector<16x512xf32>
    %c0_6 = arith.constant 0 : index
    %c0_7 = arith.constant 0 : index
    %9 = vector.load %arg5[%c0_6, %c0_7] : memref<128x512xf32, #tpu.memory_space<vmem>>, vector<128x512xf32>
    %cst_8 = arith.constant dense<0.000000e+00> : vector<16x512xf32>
    %10 = tpu.matmul %3, %9, %cst_8 {dimension_numbers = #tpu.dot_dimension_numbers<[1], [0], [0], [1], [0, 0, 1, 1], [], []>} : vector<16x128xf32>, vector<128x512xf32>, vector<16x512xf32> -> vector<16x512xf32>
    %c0_9 = arith.constant 0 : index
    %c0_10 = arith.constant 0 : index
    %11 = vector.load %arg6[%c0_9, %c0_10] : memref<1x512xf32, #tpu.memory_space<vmem>>, vector<1x512xf32>
    %12 = vector.broadcast %11 : vector<1x512xf32> to vector<16x512xf32>
    %13 = arith.addf %10, %12 : vector<16x512xf32>
    %cst_11 = arith.constant 5.000000e-01 : f32
    %14 = vector.broadcast %cst_11 : f32 to vector<16x512xf32>
    %15 = arith.mulf %14, %13 : vector<16x512xf32>
    %cst_12 = arith.constant 0.707106769 : f32
    %16 = vector.broadcast %cst_12 : f32 to vector<16x512xf32>
    %17 = arith.mulf %13, %16 : vector<16x512xf32>
    %18 = math.erf %17 : vector<16x512xf32>
    %cst_13 = arith.constant 1.000000e+00 : f32
    %19 = vector.broadcast %cst_13 : f32 to vector<16x512xf32>
    %20 = arith.addf %19, %18 : vector<16x512xf32>
    %21 = arith.mulf %15, %20 : vector<16x512xf32>
    %22 = arith.mulf %8, %21 : vector<16x512xf32>
    %c0_14 = arith.constant 0 : index
    %c0_15 = arith.constant 0 : index
    %23 = vector.load %arg10[%c0_14, %c0_15] : memref<16x128xf32, #tpu.memory_space<vmem>>, vector<16x128xf32>
    %c0_16 = arith.constant 0 : index
    %c0_17 = arith.constant 0 : index
    %24 = vector.load %arg7[%c0_16, %c0_17] : memref<512x128xf32, #tpu.memory_space<vmem>>, vector<512x128xf32>
    %cst_18 = arith.constant dense<0.000000e+00> : vector<16x128xf32>
    %25 = tpu.matmul %22, %24, %cst_18 {dimension_numbers = #tpu.dot_dimension_numbers<[1], [0], [0], [1], [0, 0, 1, 1], [], []>} : vector<16x512xf32>, vector<512x128xf32>, vector<16x128xf32> -> vector<16x128xf32>
    %26 = arith.addf %23, %25 : vector<16x128xf32>
    %c0_19 = arith.constant 0 : index
    %c0_20 = arith.constant 0 : index
    %27 = vector.load %arg10[%c0_19, %c0_20] : memref<16x128xf32, #tpu.memory_space<vmem>>, vector<16x128xf32>
    tpu.vector_store %arg10[%c0_19, %c0_20], %26 {strides = array<i32>} : memref<16x128xf32, #tpu.memory_space<vmem>>, vector<16x128xf32>,
    %c0_i32_21 = arith.constant 0 : i32
    %28 = arith.cmpi eq, %arg1, %c0_i32_21 : i32
    %29 = arith.extui %28 : i1 to i32
    %c0_i32_22 = arith.constant 0 : i32
    %30 = arith.cmpi ne, %29, %c0_i32_22 : i32
    scf.if %30 {
      %c0_23 = arith.constant 0 : index
      %c0_24 = arith.constant 0 : index
      %31 = vector.load %arg10[%c0_23, %c0_24] : memref<16x128xf32, #tpu.memory_space<vmem>>, vector<16x128xf32>
      %c0_25 = arith.constant 0 : index
      %c0_26 = arith.constant 0 : index
      %32 = vector.load %arg8[%c0_25, %c0_26] : memref<1x128xf32, #tpu.memory_space<vmem>>, vector<1x128xf32>
      %33 = vector.broadcast %32 : vector<1x128xf32> to vector<16x128xf32>
      %34 = arith.addf %31, %33 : vector<16x128xf32>
      %c0_27 = arith.constant 0 : index
      %c0_28 = arith.constant 0 : index
      %35 = vector.load %arg9[%c0_27, %c0_28] : memref<16x128xf32, #tpu.memory_space<vmem>>, vector<16x128xf32>
      tpu.vector_store %arg9[%c0_27, %c0_28], %34 {strides = array<i32>} : memref<16x128xf32, #tpu.memory_space<vmem>>, vector<16x128xf32>,
    } else {
    }
    return
  }
  func.func @transform_0(%arg0: i32, %arg1: i32) -> (i32, i32) {
    %c0_i32 = arith.constant 0 : i32
    %c0_i32_0 = arith.constant 0 : i32
    return %arg0, %c0_i32 : i32, i32
  }
  func.func @transform_1(%arg0: i32, %arg1: i32) -> (i32, i32) {
    %c0_i32 = arith.constant 0 : i32
    %c0_i32_0 = arith.constant 0 : i32
    return %c0_i32, %arg1 : i32, i32
  }
  func.func @transform_2(%arg0: i32, %arg1: i32) -> (i32, i32) {
    %c0_i32 = arith.constant 0 : i32
    %c0_i32_0 = arith.constant 0 : i32
    return %c0_i32, %arg1 : i32, i32
  }
  func.func @transform_3(%arg0: i32, %arg1: i32) -> (i32, i32) {
    %c1_i32 = arith.constant 1 : i32
    %0 = arith.addi %arg1, %c1_i32 : i32
    %c0_i32 = arith.constant 0 : i32
    %c0_i32_0 = arith.constant 0 : i32
    return %c0_i32, %0 : i32, i32
  }
  func.func @transform_4(%arg0: i32, %arg1: i32) -> (i32, i32) {
    %c1_i32 = arith.constant 1 : i32
    %0 = arith.addi %arg1, %c1_i32 : i32
    %c0_i32 = arith.constant 0 : i32
    %c0_i32_0 = arith.constant 0 : i32
    return %c0_i32, %0 : i32, i32
  }
  func.func @transform_5(%arg0: i32, %arg1: i32) -> (i32, i32) {
    %c0_i32 = arith.constant 0 : i32
    %c0_i32_0 = arith.constant 0 : i32
    return %arg1, %c0_i32 : i32, i32
  }
  func.func @transform_6(%arg0: i32, %arg1: i32) -> (i32, i32) {
    %c0_i32 = arith.constant 0 : i32
    %c0_i32_0 = arith.constant 0 : i32
    %c0_i32_1 = arith.constant 0 : i32
    return %c0_i32, %c0_i32_0 : i32, i32
  }
  func.func @transform_7(%arg0: i32, %arg1: i32) -> (i32, i32) {
    %c0_i32 = arith.constant 0 : i32
    %c0_i32_0 = arith.constant 0 : i32
    return %arg0, %c0_i32 : i32, i32
  }
}

</mosaic_0001>

<llo_original>
// kernel: tpu_custom_call.1
$region0: #{tpu_custom_call.1}
  #allocation0 [shape = 'u32[]', space=smem, size = 0x4, offset = 0x4, fixed_abs, tag = 'smem constant byte address 0x4 - core index']
  #allocation1 [shape = 'u32[144,128]{1,0:T(1,128)}', space=vmem, size = 0x12000, scoped, tag = 'internal scratch']
  #allocation2 [shape = 'f32[16,128]{1,0:T(8,128)}', space=vmem, size = 0x2000, scoped, tag = 'scratch operand']
  %s0 = inlined_call_operand.hbm [shape: f32[16,128], index: 0, kind: input, shape index: {}]
  %s1 = inlined_call_operand.hbm [shape: f32[128,1024], index: 1, kind: input, shape index: {}]
  %s2 = inlined_call_operand.hbm [shape: f32[1,1024], index: 2, kind: input, shape index: {}]
  %s3 = inlined_call_operand.hbm [shape: f32[128,1024], index: 3, kind: input, shape index: {}]
  %s4 = inlined_call_operand.vmem [shape: f32[1,1024], index: 4, kind: input, shape index: {}]
  %s5 = inlined_call_operand.hbm [shape: f32[512,128], index: 5, kind: input, shape index: {}]
  %s6 = inlined_call_operand.vmem [shape: f32[1,128], index: 6, kind: input, shape index: {}]
  %s7 = inlined_call_operand.hbm [shape: f32[16,128], index: 7, kind: output, shape index: {}]
  %s8 = sld [smem:[#allocation0]]
  $region66: #{tpu_custom_call.1} parent=0
    _
  %s10 = ssub.s32 1, %s8
  %s11 = scalar_select 0, %s10, %s8
  $region1: #{tpu_custom_call.1} parent=0
    #allocation3 [shape = 'u8[8192]{0}', space=vmem, size = 0x2000, scoped, tag = 'input window, operand 0, single buffered']
    #allocation4 [shape = 's32[1]{0}', space=sflag, size = 0x4, scoped, tag = 'scoped memory for tpu_custom_call.1']
    #allocation5 [shape = 's32[1]{0}', space=sflag, size = 0x4, scoped, tag = 'scoped memory for tpu_custom_call.1']
    #allocation6 [shape = 'u8[262144]{0}', space=vmem, size = 0x40000, scoped, tag = 'input window, operand 1, single buffered']
    #allocation7 [shape = 's32[1]{0}', space=sflag, size = 0x4, scoped, tag = 'scoped memory for tpu_custom_call.1']
    #allocation8 [shape = 'u8[2048]{0}', space=vmem, size = 0x800, scoped, tag = 'input window, operand 2, single buffered']
    #allocation9 [shape = 'u8[262144]{0}', space=vmem, size = 0x40000, scoped, tag = 'input window, operand 3, single buffered']
    #allocation10 [shape = 's32[1]{0}', space=sflag, size = 0x4, scoped, tag = 'scoped memory for tpu_custom_call.1']
    #allocation11 [shape = 'u8[262144]{0}', space=vmem, size = 0x40000, scoped, tag = 'input window, operand 5, single buffered']
    #allocation12 [shape = 'u8[8192]{0}', space=vmem, size = 0x2000, scoped, tag = 'output window, operand 0, single buffered']
    %12 = vsyncpa [#allocation4], 0
    %13 = vsyncpa [#allocation7], 0
    %14 = vsyncpa [#allocation10], 0
    %15 = vsyncpa [#allocation5], 0
    // Predicated region
    $region2: #{tpu_custom_call.1} parent=1 // pred_check
      _
    $region3: #{tpu_custom_call.1} parent=1 // pred_check_branch
      %17 = sbr.rel (0) target = $region5
    $region4: #{tpu_custom_call.1} parent=1 // pred_region
      %s19 = ssub.s32 256, 256
      %20 = vsyncadd [#allocation4], %s19
      %s21 = sshll.u32 [#allocation3], 4
      %s22 = int_to_ptr.vmem [resolvable:$true] %s21
      %27 = dma.hbm_to_vmem [thread:$0]  %s0, 256, %s22, [#allocation4], 128, 128, 8
    $region5: #{tpu_custom_call.1} parent=1 // pred_fallthru
      _
    // Predicated region
    $region6: #{tpu_custom_call.1} parent=1 // pred_check
      _
    $region7: #{tpu_custom_call.1} parent=1 // pred_check_branch
      %29 = sbr.rel (0) target = $region9
    $region8: #{tpu_custom_call.1} parent=1 // pred_region
      %s31 = ssub.s32 8192, 8192
      %32 = vsyncadd [#allocation7], %s31
      %s33 = sshll.u32 [#allocation6], 4
      %s34 = int_to_ptr.vmem [resolvable:$true] %s33
      %39 = dma.hbm_to_vmem [thread:$0]  %s1, 8192, %s34, [#allocation7], 1024, 512, 32
    $region9: #{tpu_custom_call.1} parent=1 // pred_fallthru
      _
    // Predicated region
    $region10: #{tpu_custom_call.1} parent=1 // pred_check
      _
    $region11: #{tpu_custom_call.1} parent=1 // pred_check_branch
      %41 = sbr.rel (0) target = $region13
    $region12: #{tpu_custom_call.1} parent=1 // pred_region
      %s43 = ssub.s32 64, 64
      %44 = vsyncadd [#allocation7], %s43
      %s46 = sshll.u32 [#allocation8], 4
      %s47 = int_to_ptr.vmem [resolvable:$true] %s46
      %49 = dma.hbm_to_vmem [thread:$0]  %s2, 64, %s47, [#allocation7]
    $region13: #{tpu_custom_call.1} parent=1 // pred_fallthru
      _
    // Predicated region
    $region14: #{tpu_custom_call.1} parent=1 // pred_check
      _
    $region15: #{tpu_custom_call.1} parent=1 // pred_check_branch
      %51 = sbr.rel (0) target = $region17
    $region16: #{tpu_custom_call.1} parent=1 // pred_region
      %s52 = sadd.s32 0, 1
      %s53 = smul.u32 4, %s52
      %s55 = ssub.s32 8192, 8192
      %56 = vsyncadd [#allocation10], %s55
      %s57 = smul.addr %s53, 128
      %s58 = scalar_lea.hbm %s3, %s57
      %s59 = sshll.u32 [#allocation9], 4
      %s60 = int_to_ptr.vmem [resolvable:$true] %s59
      %65 = dma.hbm_to_vmem [thread:$0]  %s58, 8192, %s60, [#allocation10], 1024, 512, 32
    $region17: #{tpu_custom_call.1} parent=1 // pred_fallthru
      _
    // Predicated region
    $region18: #{tpu_custom_call.1} parent=1 // pred_check
      _
    $region19: #{tpu_custom_call.1} parent=1 // pred_check_branch
      %67 = sbr.rel (0) target = $region21
    $region20: #{tpu_custom_call.1} parent=1 // pred_region
      %s68 = sadd.s32 0, 1
      %s69 = smul.u32 4, %s68
      %p70 = scmp.lt.s32.totalorder %s69, 7
      %s71 = scalar_select %p70, %s69, 7
      %s72 = scalar_lea.vmem %s4, %s71
      %s73 = sadd.s32 0, 1
      %s74 = smul.u32 4, %s73
    $region21: #{tpu_custom_call.1} parent=1 // pred_fallthru
      _
    // Predicated region
    $region22: #{tpu_custom_call.1} parent=1 // pred_check
      _
    $region23: #{tpu_custom_call.1} parent=1 // pred_check_branch
      %76 = sbr.rel (0) target = $region25
    $region24: #{tpu_custom_call.1} parent=1 // pred_region
      %s78 = ssub.s32 8192, 8192
      %79 = vsyncadd [#allocation10], %s78
      %s80 = sshll.u32 [#allocation11], 4
      %s81 = int_to_ptr.vmem [resolvable:$true] %s80
      %86 = dma.hbm_to_vmem [thread:$0]  %s5, 8192, %s81, [#allocation10], 128, 128, 8
    $region25: #{tpu_custom_call.1} parent=1 // pred_fallthru
      _
    // Predicated region
    $region26: #{tpu_custom_call.1} parent=1 // pred_check
      _
    $region27: #{tpu_custom_call.1} parent=1 // pred_check_branch
      %88 = sbr.rel (0) target = $region29
    $region28: #{tpu_custom_call.1} parent=1 // pred_region
      _
    $region29: #{tpu_custom_call.1} parent=1 // pred_fallthru
      _
    // Predicated region
    $region30: #{tpu_custom_call.1} parent=1 // pred_check
      _
    $region31: #{tpu_custom_call.1} parent=1 // pred_check_branch
      %90 = sbr.rel (0) target = $region33
    $region32: #{tpu_custom_call.1} parent=1 // pred_region
      %91 = dma.done [#allocation4], 256
    $region33: #{tpu_custom_call.1} parent=1 // pred_fallthru
      _
    // Predicated region
    $region34: #{tpu_custom_call.1} parent=1 // pred_check
      _
    $region35: #{tpu_custom_call.1} parent=1 // pred_check_branch
      %93 = sbr.rel (0) target = $region37
    $region36: #{tpu_custom_call.1} parent=1 // pred_region
      %94 = dma.done [#allocation7], 8192
    $region37: #{tpu_custom_call.1} parent=1 // pred_fallthru
      _
    // Predicated region
    $region38: #{tpu_custom_call.1} parent=1 // pred_check
      _
    $region39: #{tpu_custom_call.1} parent=1 // pred_check_branch
      %96 = sbr.rel (0) target = $region41
    $region40: #{tpu_custom_call.1} parent=1 // pred_region
      %97 = dma.done [#allocation7], 64
    $region41: #{tpu_custom_call.1} parent=1 // pred_fallthru
      _
    // Predicated region
    $region42: #{tpu_custom_call.1} parent=1 // pred_check
      _
    $region43: #{tpu_custom_call.1} parent=1 // pred_check_branch
      %99 = sbr.rel (0) target = $region45
    $region44: #{tpu_custom_call.1} parent=1 // pred_region
      %100 = dma.done [#allocation10], 8192
    $region45: #{tpu_custom_call.1} parent=1 // pred_fallthru
      _
    // Predicated region
    $region46: #{tpu_custom_call.1} parent=1 // pred_check
      _
    $region47: #{tpu_custom_call.1} parent=1 // pred_check_branch
      %102 = sbr.rel (0) target = $region49
    $region48: #{tpu_custom_call.1} parent=1 // pred_region
      %103 = dma.done [#allocation10], 8192
    $region49: #{tpu_custom_call.1} parent=1 // pred_fallthru
      _
    %s104 = sadd.s32 0, 1
    %s105 = smul.u32 4, %s104
    %p106 = scmp.lt.s32.totalorder %s105, 7
    %s107 = scalar_select %p106, %s105, 7
    %s108 = scalar_lea.vmem %s4, %s107
    %s109 = sadd.s32 0, 1
    %s110 = smul.u32 4, %s109
    %s111 = sadd.s32 0, 1
    %s112 = smul.u32 4, %s111
    %p113 = scmp.lt.s32.totalorder %s112, 7
    %s114 = scalar_select %p113, %s112, 7
    %s115 = scalar_lea.vmem %s4, %s114
    %s116 = sadd.s32 0, 1
    %s117 = smul.u32 4, %s116
    %p118 = scmp.eq.s32.totalorder 0, 0
    // Predicated region
    $region50: #{tpu_custom_call.1} parent=1 // pred_check
      %p119 = pneg %p118
    $region51: #{tpu_custom_call.1} parent=1 // pred_check_branch
      %121 = sbr.rel (%p119) target = $region53
    $region52: #{tpu_custom_call.1} parent=1 // pred_region
      %122 = vst [vmem:[#allocation2] sm:$0xff] 0.0
      %123 = vst [vmem:[#allocation2 + $0x8] sm:$0xff] 0.0
    $region53: #{tpu_custom_call.1} parent=1 // pred_fallthru
      _
    %v124 = vld [vmem:[#allocation3] sm:$0xff]
    %v125 = vld [vmem:[#allocation3 + $0x8] sm:$0xff]
    %v126 = vld [vmem:[#allocation6] sm:$0xff]
    %v127 = vld [vmem:[#allocation6 + $0x8] sm:$0xff]
    %v128 = vld [vmem:[#allocation6 + $0x10] sm:$0xff]
    %v129 = vld [vmem:[#allocation6 + $0x18] sm:$0xff]
    %v130 = vld [vmem:[#allocation6 + $0x20] sm:$0xff]
    %v131 = vld [vmem:[#allocation6 + $0x28] sm:$0xff]
    %v132 = vld [vmem:[#allocation6 + $0x30] sm:$0xff]
    %v133 = vld [vmem:[#allocation6 + $0x38] sm:$0xff]
    %v134 = vld [vmem:[#allocation6 + $0x40] sm:$0xff]
    %v135 = vld [vmem:[#allocation6 + $0x48] sm:$0xff]
    %v136 = vld [vmem:[#allocation6 + $0x50] sm:$0xff]
    %v137 = vld [vmem:[#allocation6 + $0x58] sm:$0xff]
    %v138 = vld [vmem:[#allocation6 + $0x60] sm:$0xff]
    %v139 = vld [vmem:[#allocation6 + $0x68] sm:$0xff]
    %v140 = vld [vmem:[#allocation6 + $0x70] sm:$0xff]
    %v141 = vld [vmem:[#allocation6 + $0x78] sm:$0xff]
    %v142 = vld [vmem:[#allocation6 + $0x80] sm:$0xff]
    %v143 = vld [vmem:[#allocation6 + $0x88] sm:$0xff]
    %v144 = vld [vmem:[#allocation6 + $0x90] sm:$0xff]
    %v145 = vld [vmem:[#allocation6 + $0x98] sm:$0xff]
    %v146 = vld [vmem:[#allocation6 + $0xa0] sm:$0xff]
    %v147 = vld [vmem:[#allocation6 + $0xa8] sm:$0xff]
    %v148 = vld [vmem:[#allocation6 + $0xb0] sm:$0xff]
    %v149 = vld [vmem:[#allocation6 + $0xb8] sm:$0xff]
    %v150 = vld [vmem:[#allocation6 + $0xc0] sm:$0xff]
    %v151 = vld [vmem:[#allocation6 + $0xc8] sm:$0xff]
    %v152 = vld [vmem:[#allocation6 + $0xd0] sm:$0xff]
    %v153 = vld [vmem:[#allocation6 + $0xd8] sm:$0xff]
    %v154 = vld [vmem:[#allocation6 + $0xe0] sm:$0xff]
    %v155 = vld [vmem:[#allocation6 + $0xe8] sm:$0xff]
    %v156 = vld [vmem:[#allocation6 + $0xf0] sm:$0xff]
    %v157 = vld [vmem:[#allocation6 + $0xf8] sm:$0xff]
    %v158 = vld [vmem:[#allocation6 + $0x100] sm:$0xff]
    %v159 = vld [vmem:[#allocation6 + $0x108] sm:$0xff]
    %v160 = vld [vmem:[#allocation6 + $0x110] sm:$0xff]
    %v161 = vld [vmem:[#allocation6 + $0x118] sm:$0xff]
    %v162 = vld [vmem:[#allocation6 + $0x120] sm:$0xff]
    %v163 = vld [vmem:[#allocation6 + $0x128] sm:$0xff]
    %v164 = vld [vmem:[#allocation6 + $0x130] sm:$0xff]
    %v165 = vld [vmem:[#allocation6 + $0x138] sm:$0xff]
    %v166 = vld [vmem:[#allocation6 + $0x140] sm:$0xff]
    %v167 = vld [vmem:[#allocation6 + $0x148] sm:$0xff]
    %v168 = vld [vmem:[#allocation6 + $0x150] sm:$0xff]
    %v169 = vld [vmem:[#allocation6 + $0x158] sm:$0xff]
    %v170 = vld [vmem:[#allocation6 + $0x160] sm:$0xff]
    %v171 = vld [vmem:[#allocation6 + $0x168] sm:$0xff]
    %v172 = vld [vmem:[#allocation6 + $0x170] sm:$0xff]
    %v173 = vld [vmem:[#allocation6 + $0x178] sm:$0xff]
    %v174 = vld [vmem:[#allocation6 + $0x180] sm:$0xff]
    %v175 = vld [vmem:[#allocation6 + $0x188] sm:$0xff]
    %v176 = vld [vmem:[#allocation6 + $0x190] sm:$0xff]
    %v177 = vld [vmem:[#allocation6 + $0x198] sm:$0xff]
    %v178 = vld [vmem:[#allocation6 + $0x1a0] sm:$0xff]
    %v179 = vld [vmem:[#allocation6 + $0x1a8] sm:$0xff]
    %v180 = vld [vmem:[#allocation6 + $0x1b0] sm:$0xff]
    %v181 = vld [vmem:[#allocation6 + $0x1b8] sm:$0xff]
    %v182 = vld [vmem:[#allocation6 + $0x1c0] sm:$0xff]
    %v183 = vld [vmem:[#allocation6 + $0x1c8] sm:$0xff]
    %v184 = vld [vmem:[#allocation6 + $0x1d0] sm:$0xff]
    %v185 = vld [vmem:[#allocation6 + $0x1d8] sm:$0xff]
    %v186 = vld [vmem:[#allocation6 + $0x1e0] sm:$0xff]
    %v187 = vld [vmem:[#allocation6 + $0x1e8] sm:$0xff]
    %v188 = vld [vmem:[#allocation6 + $0x1f0] sm:$0xff]
    %v189 = vld [vmem:[#allocation6 + $0x1f8] sm:$0xff]
    %v190 = vld [vmem:[#allocation8] sm:$0xf]
    %v192 = vlaneseq
    %v193 = vshrl.u32 %v192, 7
    %v194 = vsub.s32 0, %v193
    %v195 = vrot.slane %v190, %v194
    %v196 = vlaneseq
    %v197 = vshrl.u32 %v196, 7
    %v198 = vsub.s32 1, %v197
    %v199 = vrot.slane %v190, %v198
    %v200 = vlaneseq
    %v201 = vshrl.u32 %v200, 7
    %v202 = vsub.s32 2, %v201
    %v203 = vrot.slane %v190, %v202
    %v204 = vlaneseq
    %v205 = vshrl.u32 %v204, 7
    %v206 = vsub.s32 3, %v205
    %v207 = vrot.slane %v190, %v206
    %212 = vmatprep.subr.mxu0 %v127
    %213 = vmatpush1.msra.mxu0 %v126
    %214 = vmatprep.subr.mxu0 %v131
    %215 = vmatpush1.msra.mxu0 %v130
    %216 = vmatprep.subr.mxu0 %v135
    %217 = vmatpush1.msra.mxu0 %v134
    %218 = vmatprep.subr.mxu0 %v139
    %219 = vmatpush1.msra.mxu0 %v138
    %220 = vmatprep.subr.mxu0 %v143
    %221 = vmatpush1.msra.mxu0 %v142
    %222 = vmatprep.subr.mxu0 %v147
    %223 = vmatpush1.msra.mxu0 %v146
    %224 = vmatprep.subr.mxu0 %v151
    %225 = vmatpush1.msra.mxu0 %v150
    %226 = vmatprep.subr.mxu0 %v155
    %227 = vmatpush1.msra.mxu0 %v154
    %228 = vmatprep.subr.mxu0 %v159
    %229 = vmatpush1.msra.mxu0 %v158
    %230 = vmatprep.subr.mxu0 %v163
    %231 = vmatpush1.msra.mxu0 %v162
    %232 = vmatprep.subr.mxu0 %v167
    %233 = vmatpush1.msra.mxu0 %v166
    %234 = vmatprep.subr.mxu0 %v171
    %235 = vmatpush1.msra.mxu0 %v170
    %236 = vmatprep.subr.mxu0 %v175
    %237 = vmatpush1.msra.mxu0 %v174
    %238 = vmatprep.subr.mxu0 %v179
    %239 = vmatpush1.msra.mxu0 %v178
    %240 = vmatprep.subr.mxu0 %v183
    %241 = vmatpush1.msra.mxu0 %v182
    %242 = vmatprep.subr.mxu0 %v187
    %243 = vmatpush1.msra.mxu0 %v186
    %244 = vmatprep.subr.mxu0 0.0
    %245 = vmatpush1.msra.mxu0 0.0
    %246 = vmatprep.subr.mxu0 0.0
    %247 = vmatpush1.msra.mxu0 0.0
    %248 = vmatprep.subr.mxu0 0.0
    %249 = vmatpush1.msra.mxu0 0.0
    %250 = vmatprep.subr.mxu0 0.0
    %251 = vmatpush1.msra.mxu0 0.0
    %252 = vmatprep.subr.mxu0 0.0
    %253 = vmatpush1.msra.mxu0 0.0
    %254 = vmatprep.subr.mxu0 0.0
    %255 = vmatpush1.msra.mxu0 0.0
    %256 = vmatprep.subr.mxu0 0.0
    %257 = vmatpush1.msra.mxu0 0.0
    %258 = vmatprep.subr.mxu0 0.0
    %259 = vmatpush1.msra.mxu0 0.0
    %260 = vmatprep.subr.mxu0 0.0
    %261 = vmatpush1.msra.mxu0 0.0
    %262 = vmatprep.subr.mxu0 0.0
    %263 = vmatpush1.msra.mxu0 0.0
    %264 = vmatprep.subr.mxu0 0.0
    %265 = vmatpush1.msra.mxu0 0.0
    %266 = vmatprep.subr.mxu0 0.0
    %267 = vmatpush1.msra.mxu0 0.0
    %268 = vmatprep.subr.mxu0 0.0
    %269 = vmatpush1.msra.mxu0 0.0
    %270 = vmatprep.subr.mxu0 0.0
    %271 = vmatpush1.msra.mxu0 0.0
    %272 = vmatprep.subr.mxu0 0.0
    %273 = vmatpush1.msra.mxu0 0.0
    %274 = vmatprep.subr.mxu0 0.0
    %275 = vmatpush1.msra.mxu0 0.0
    %276 = vmatprep.mubr.f32.mxu0 0.0
    %277 = vmatmul.mubr.f32.gmra.mrb[0].mxu0 %v124
    %v278 = vpop.f32.mrb[0].mxu0
    %v279 = vadd.f32 %v195, %v278
    %v280 = vpop.f32.mrb[0].mxu0
    %v281 = vadd.f32 %v199, %v280
    %282 = vmatprep.mubr.f32.mxu0 0.0
    %283 = vmatmul.mubr.f32.gmra.mrb[0].mxu0 %v125
    %v284 = vpop.f32.mrb[0].mxu0
    %v285 = vadd.f32 %v195, %v284
    %v286 = vpop.f32.mrb[0].mxu0
    %v287 = vadd.f32 %v199, %v286
    %288 = vdwg.mxu0
    %289 = vmatprep.subr.mxu0 %v129
    %290 = vmatpush1.msra.mxu0 %v128
    %291 = vmatprep.subr.mxu0 %v133
    %292 = vmatpush1.msra.mxu0 %v132
    %293 = vmatprep.subr.mxu0 %v137
    %294 = vmatpush1.msra.mxu0 %v136
    %295 = vmatprep.subr.mxu0 %v141
    %296 = vmatpush1.msra.mxu0 %v140
    %297 = vmatprep.subr.mxu0 %v145
    %298 = vmatpush1.msra.mxu0 %v144
    %299 = vmatprep.subr.mxu0 %v149
    %300 = vmatpush1.msra.mxu0 %v148
    %301 = vmatprep.subr.mxu0 %v153
    %302 = vmatpush1.msra.mxu0 %v152
    %303 = vmatprep.subr.mxu0 %v157
    %304 = vmatpush1.msra.mxu0 %v156
    %305 = vmatprep.subr.mxu0 %v161
    %306 = vmatpush1.msra.mxu0 %v160
    %307 = vmatprep.subr.mxu0 %v165
    %308 = vmatpush1.msra.mxu0 %v164
    %309 = vmatprep.subr.mxu0 %v169
    %310 = vmatpush1.msra.mxu0 %v168
    %311 = vmatprep.subr.mxu0 %v173
    %312 = vmatpush1.msra.mxu0 %v172
    %313 = vmatprep.subr.mxu0 %v177
    %314 = vmatpush1.msra.mxu0 %v176
    %315 = vmatprep.subr.mxu0 %v181
    %316 = vmatpush1.msra.mxu0 %v180
    %317 = vmatprep.subr.mxu0 %v185
    %318 = vmatpush1.msra.mxu0 %v184
    %319 = vmatprep.subr.mxu0 %v189
    %320 = vmatpush1.msra.mxu0 %v188
    %321 = vmatprep.subr.mxu0 0.0
    %322 = vmatpush1.msra.mxu0 0.0
    %323 = vmatprep.subr.mxu0 0.0
    %324 = vmatpush1.msra.mxu0 0.0
    %325 = vmatprep.subr.mxu0 0.0
    %326 = vmatpush1.msra.mxu0 0.0
    %327 = vmatprep.subr.mxu0 0.0
    %328 = vmatpush1.msra.mxu0 0.0
    %329 = vmatprep.subr.mxu0 0.0
    %330 = vmatpush1.msra.mxu0 0.0
    %331 = vmatprep.subr.mxu0 0.0
    %332 = vmatpush1.msra.mxu0 0.0
    %333 = vmatprep.subr.mxu0 0.0
    %334 = vmatpush1.msra.mxu0 0.0
    %335 = vmatprep.subr.mxu0 0.0
    %336 = vmatpush1.msra.mxu0 0.0
    %337 = vmatprep.subr.mxu0 0.0
    %338 = vmatpush1.msra.mxu0 0.0
    %339 = vmatprep.subr.mxu0 0.0
    %340 = vmatpush1.msra.mxu0 0.0
    %341 = vmatprep.subr.mxu0 0.0
    %342 = vmatpush1.msra.mxu0 0.0
    %343 = vmatprep.subr.mxu0 0.0
    %344 = vmatpush1.msra.mxu0 0.0
    %345 = vmatprep.subr.mxu0 0.0
    %346 = vmatpush1.msra.mxu0 0.0
    %347 = vmatprep.subr.mxu0 0.0
    %348 = vmatpush1.msra.mxu0 0.0
    %349 = vmatprep.subr.mxu0 0.0
    %350 = vmatpush1.msra.mxu0 0.0
    %351 = vmatprep.subr.mxu0 0.0
    %352 = vmatpush1.msra.mxu0 0.0
    %353 = vmatprep.mubr.f32.mxu0 0.0
    %354 = vmatmul.mubr.f32.gmra.mrb[0].mxu0 %v124
    %v355 = vpop.f32.mrb[0].mxu0
    %v356 = vadd.f32 %v203, %v355
    %v357 = vpop.f32.mrb[0].mxu0
    %v358 = vadd.f32 %v207, %v357
    %359 = vmatprep.mubr.f32.mxu0 0.0
    %360 = vmatmul.mubr.f32.gmra.mrb[0].mxu0 %v125
    %v361 = vpop.f32.mrb[0].mxu0
    %v362 = vadd.f32 %v203, %v361
    %v363 = vpop.f32.mrb[0].mxu0
    %v364 = vadd.f32 %v207, %v363
    %365 = vdwg.mxu0
    %v366 = vld [vmem:[#allocation9] sm:$0xff]
    %v367 = vld [vmem:[#allocation9 + $0x8] sm:$0xff]
    %v368 = vld [vmem:[#allocation9 + $0x10] sm:$0xff]
    %v369 = vld [vmem:[#allocation9 + $0x18] sm:$0xff]
    %v370 = vld [vmem:[#allocation9 + $0x20] sm:$0xff]
    %v371 = vld [vmem:[#allocation9 + $0x28] sm:$0xff]
    %v372 = vld [vmem:[#allocation9 + $0x30] sm:$0xff]
    %v373 = vld [vmem:[#allocation9 + $0x38] sm:$0xff]
    %v374 = vld [vmem:[#allocation9 + $0x40] sm:$0xff]
    %v375 = vld [vmem:[#allocation9 + $0x48] sm:$0xff]
    %v376 = vld [vmem:[#allocation9 + $0x50] sm:$0xff]
    %v377 = vld [vmem:[#allocation9 + $0x58] sm:$0xff]
    %v378 = vld [vmem:[#allocation9 + $0x60] sm:$0xff]
    %v379 = vld [vmem:[#allocation9 + $0x68] sm:$0xff]
    %v380 = vld [vmem:[#allocation9 + $0x70] sm:$0xff]
    %v381 = vld [vmem:[#allocation9 + $0x78] sm:$0xff]
    %v382 = vld [vmem:[#allocation9 + $0x80] sm:$0xff]
    %v383 = vld [vmem:[#allocation9 + $0x88] sm:$0xff]
    %v384 = vld [vmem:[#allocation9 + $0x90] sm:$0xff]
    %v385 = vld [vmem:[#allocation9 + $0x98] sm:$0xff]
    %v386 = vld [vmem:[#allocation9 + $0xa0] sm:$0xff]
    %v387 = vld [vmem:[#allocation9 + $0xa8] sm:$0xff]
    %v388 = vld [vmem:[#allocation9 + $0xb0] sm:$0xff]
    %v389 = vld [vmem:[#allocation9 + $0xb8] sm:$0xff]
    %v390 = vld [vmem:[#allocation9 + $0xc0] sm:$0xff]
    %v391 = vld [vmem:[#allocation9 + $0xc8] sm:$0xff]
    %v392 = vld [vmem:[#allocation9 + $0xd0] sm:$0xff]
    %v393 = vld [vmem:[#allocation9 + $0xd8] sm:$0xff]
    %v394 = vld [vmem:[#allocation9 + $0xe0] sm:$0xff]
    %v395 = vld [vmem:[#allocation9 + $0xe8] sm:$0xff]
    %v396 = vld [vmem:[#allocation9 + $0xf0] sm:$0xff]
    %v397 = vld [vmem:[#allocation9 + $0xf8] sm:$0xff]
    %v398 = vld [vmem:[#allocation9 + $0x100] sm:$0xff]
    %v399 = vld [vmem:[#allocation9 + $0x108] sm:$0xff]
    %v400 = vld [vmem:[#allocation9 + $0x110] sm:$0xff]
    %v401 = vld [vmem:[#allocation9 + $0x118] sm:$0xff]
    %v402 = vld [vmem:[#allocation9 + $0x120] sm:$0xff]
    %v403 = vld [vmem:[#allocation9 + $0x128] sm:$0xff]
    %v404 = vld [vmem:[#allocation9 + $0x130] sm:$0xff]
    %v405 = vld [vmem:[#allocation9 + $0x138] sm:$0xff]
    %v406 = vld [vmem:[#allocation9 + $0x140] sm:$0xff]
    %v407 = vld [vmem:[#allocation9 + $0x148] sm:$0xff]
    %v408 = vld [vmem:[#allocation9 + $0x150] sm:$0xff]
    %v409 = vld [vmem:[#allocation9 + $0x158] sm:$0xff]
    %v410 = vld [vmem:[#allocation9 + $0x160] sm:$0xff]
    %v411 = vld [vmem:[#allocation9 + $0x168] sm:$0xff]
    %v412 = vld [vmem:[#allocation9 + $0x170] sm:$0xff]
    %v413 = vld [vmem:[#allocation9 + $0x178] sm:$0xff]
    %v414 = vld [vmem:[#allocation9 + $0x180] sm:$0xff]
    %v415 = vld [vmem:[#allocation9 + $0x188] sm:$0xff]
    %v416 = vld [vmem:[#allocation9 + $0x190] sm:$0xff]
    %v417 = vld [vmem:[#allocation9 + $0x198] sm:$0xff]
    %v418 = vld [vmem:[#allocation9 + $0x1a0] sm:$0xff]
    %v419 = vld [vmem:[#allocation9 + $0x1a8] sm:$0xff]
    %v420 = vld [vmem:[#allocation9 + $0x1b0] sm:$0xff]
    %v421 = vld [vmem:[#allocation9 + $0x1b8] sm:$0xff]
    %v422 = vld [vmem:[#allocation9 + $0x1c0] sm:$0xff]
    %v423 = vld [vmem:[#allocation9 + $0x1c8] sm:$0xff]
    %v424 = vld [vmem:[#allocation9 + $0x1d0] sm:$0xff]
    %v425 = vld [vmem:[#allocation9 + $0x1d8] sm:$0xff]
    %v426 = vld [vmem:[#allocation9 + $0x1e0] sm:$0xff]
    %v427 = vld [vmem:[#allocation9 + $0x1e8] sm:$0xff]
    %v428 = vld [vmem:[#allocation9 + $0x1f0] sm:$0xff]
    %v429 = vld [vmem:[#allocation9 + $0x1f8] sm:$0xff]
    %v430 = vld [vmem:[%s115] sm:$0xf]
    %v432 = vlaneseq
    %v433 = vshrl.u32 %v432, 7
    %v434 = vsub.s32 0, %v433
    %v435 = vrot.slane %v430, %v434
    %v436 = vlaneseq
    %v437 = vshrl.u32 %v436, 7
    %v438 = vsub.s32 1, %v437
    %v439 = vrot.slane %v430, %v438
    %v440 = vlaneseq
    %v441 = vshrl.u32 %v440, 7
    %v442 = vsub.s32 2, %v441
    %v443 = vrot.slane %v430, %v442
    %v444 = vlaneseq
    %v445 = vshrl.u32 %v444, 7
    %v446 = vsub.s32 3, %v445
    %v447 = vrot.slane %v430, %v446
    %452 = vmatprep.subr.mxu0 %v367
    %453 = vmatpush1.msra.mxu0 %v366
    %454 = vmatprep.subr.mxu0 %v371
    %455 = vmatpush1.msra.mxu0 %v370
    %456 = vmatprep.subr.mxu0 %v375
    %457 = vmatpush1.msra.mxu0 %v374
    %458 = vmatprep.subr.mxu0 %v379
    %459 = vmatpush1.msra.mxu0 %v378
    %460 = vmatprep.subr.mxu0 %v383
    %461 = vmatpush1.msra.mxu0 %v382
    %462 = vmatprep.subr.mxu0 %v387
    %463 = vmatpush1.msra.mxu0 %v386
    %464 = vmatprep.subr.mxu0 %v391
    %465 = vmatpush1.msra.mxu0 %v390
    %466 = vmatprep.subr.mxu0 %v395
    %467 = vmatpush1.msra.mxu0 %v394
    %468 = vmatprep.subr.mxu0 %v399
    %469 = vmatpush1.msra.mxu0 %v398
    %470 = vmatprep.subr.mxu0 %v403
    %471 = vmatpush1.msra.mxu0 %v402
    %472 = vmatprep.subr.mxu0 %v407
    %473 = vmatpush1.msra.mxu0 %v406
    %474 = vmatprep.subr.mxu0 %v411
    %475 = vmatpush1.msra.mxu0 %v410
    %476 = vmatprep.subr.mxu0 %v415
    %477 = vmatpush1.msra.mxu0 %v414
    %478 = vmatprep.subr.mxu0 %v419
    %479 = vmatpush1.msra.mxu0 %v418
    %480 = vmatprep.subr.mxu0 %v423
    %481 = vmatpush1.msra.mxu0 %v422
    %482 = vmatprep.subr.mxu0 %v427
    %483 = vmatpush1.msra.mxu0 %v426
    %484 = vmatprep.subr.mxu0 0.0
    %485 = vmatpush1.msra.mxu0 0.0
    %486 = vmatprep.subr.mxu0 0.0
    %487 = vmatpush1.msra.mxu0 0.0
    %488 = vmatprep.subr.mxu0 0.0
    %489 = vmatpush1.msra.mxu0 0.0
    %490 = vmatprep.subr.mxu0 0.0
    %491 = vmatpush1.msra.mxu0 0.0
    %492 = vmatprep.subr.mxu0 0.0
    %493 = vmatpush1.msra.mxu0 0.0
    %494 = vmatprep.subr.mxu0 0.0
    %495 = vmatpush1.msra.mxu0 0.0
    %496 = vmatprep.subr.mxu0 0.0
    %497 = vmatpush1.msra.mxu0 0.0
    %498 = vmatprep.subr.mxu0 0.0
    %499 = vmatpush1.msra.mxu0 0.0
    %500 = vmatprep.subr.mxu0 0.0
    %501 = vmatpush1.msra.mxu0 0.0
    %502 = vmatprep.subr.mxu0 0.0
    %503 = vmatpush1.msra.mxu0 0.0
    %504 = vmatprep.subr.mxu0 0.0
    %505 = vmatpush1.msra.mxu0 0.0
    %506 = vmatprep.subr.mxu0 0.0
    %507 = vmatpush1.msra.mxu0 0.0
    %508 = vmatprep.subr.mxu0 0.0
    %509 = vmatpush1.msra.mxu0 0.0
    %510 = vmatprep.subr.mxu0 0.0
    %511 = vmatpush1.msra.mxu0 0.0
    %512 = vmatprep.subr.mxu0 0.0
    %513 = vmatpush1.msra.mxu0 0.0
    %514 = vmatprep.subr.mxu0 0.0
    %515 = vmatpush1.msra.mxu0 0.0
    %516 = vmatprep.mubr.f32.mxu0 0.0
    %517 = vmatmul.mubr.f32.gmra.mrb[0].mxu0 %v124
    %v518 = vpop.f32.mrb[0].mxu0
    %v519 = vadd.f32 %v435, %v518
    %v520 = vpop.f32.mrb[0].mxu0
    %v521 = vadd.f32 %v439, %v520
    %522 = vmatprep.mubr.f32.mxu0 0.0
    %523 = vmatmul.mubr.f32.gmra.mrb[0].mxu0 %v125
    %v524 = vpop.f32.mrb[0].mxu0
    %v525 = vadd.f32 %v435, %v524
    %v526 = vpop.f32.mrb[0].mxu0
    %v527 = vadd.f32 %v439, %v526
    %528 = vdwg.mxu0
    %529 = vmatprep.subr.mxu0 %v369
    %530 = vmatpush1.msra.mxu0 %v368
    %531 = vmatprep.subr.mxu0 %v373
    %532 = vmatpush1.msra.mxu0 %v372
    %533 = vmatprep.subr.mxu0 %v377
    %534 = vmatpush1.msra.mxu0 %v376
    %535 = vmatprep.subr.mxu0 %v381
    %536 = vmatpush1.msra.mxu0 %v380
    %537 = vmatprep.subr.mxu0 %v385
    %538 = vmatpush1.msra.mxu0 %v384
    %539 = vmatprep.subr.mxu0 %v389
    %540 = vmatpush1.msra.mxu0 %v388
    %541 = vmatprep.subr.mxu0 %v393
    %542 = vmatpush1.msra.mxu0 %v392
    %543 = vmatprep.subr.mxu0 %v397
    %544 = vmatpush1.msra.mxu0 %v396
    %545 = vmatprep.subr.mxu0 %v401
    %546 = vmatpush1.msra.mxu0 %v400
    %547 = vmatprep.subr.mxu0 %v405
    %548 = vmatpush1.msra.mxu0 %v404
    %549 = vmatprep.subr.mxu0 %v409
    %550 = vmatpush1.msra.mxu0 %v408
    %551 = vmatprep.subr.mxu0 %v413
    %552 = vmatpush1.msra.mxu0 %v412
    %553 = vmatprep.subr.mxu0 %v417
    %554 = vmatpush1.msra.mxu0 %v416
    %555 = vmatprep.subr.mxu0 %v421
    %556 = vmatpush1.msra.mxu0 %v420
    %557 = vmatprep.subr.mxu0 %v425
    %558 = vmatpush1.msra.mxu0 %v424
    %559 = vmatprep.subr.mxu0 %v429
    %560 = vmatpush1.msra.mxu0 %v428
    %561 = vmatprep.subr.mxu0 0.0
    %562 = vmatpush1.msra.mxu0 0.0
    %563 = vmatprep.subr.mxu0 0.0
    %564 = vmatpush1.msra.mxu0 0.0
    %565 = vmatprep.subr.mxu0 0.0
    %566 = vmatpush1.msra.mxu0 0.0
    %567 = vmatprep.subr.mxu0 0.0
    %568 = vmatpush1.msra.mxu0 0.0
    %569 = vmatprep.subr.mxu0 0.0
    %570 = vmatpush1.msra.mxu0 0.0
    %571 = vmatprep.subr.mxu0 0.0
    %572 = vmatpush1.msra.mxu0 0.0
    %573 = vmatprep.subr.mxu0 0.0
    %574 = vmatpush1.msra.mxu0 0.0
    %575 = vmatprep.subr.mxu0 0.0
    %576 = vmatpush1.msra.mxu0 0.0
    %577 = vmatprep.subr.mxu0 0.0
    %578 = vmatpush1.msra.mxu0 0.0
    %579 = vmatprep.subr.mxu0 0.0
    %580 = vmatpush1.msra.mxu0 0.0
    %581 = vmatprep.subr.mxu0 0.0
    %582 = vmatpush1.msra.mxu0 0.0
    %583 = vmatprep.subr.mxu0 0.0
    %584 = vmatpush1.msra.mxu0 0.0
    %585 = vmatprep.subr.mxu0 0.0
    %586 = vmatpush1.msra.mxu0 0.0
    %587 = vmatprep.subr.mxu0 0.0
    %588 = vmatpush1.msra.mxu0 0.0
    %589 = vmatprep.subr.mxu0 0.0
    %590 = vmatpush1.msra.mxu0 0.0
    %591 = vmatprep.subr.mxu0 0.0
    %592 = vmatpush1.msra.mxu0 0.0
    %593 = vmatprep.mubr.f32.mxu0 0.0
    %594 = vmatmul.mubr.f32.gmra.mrb[0].mxu0 %v124
    %v595 = vpop.f32.mrb[0].mxu0
    %v596 = vadd.f32 %v443, %v595
    %v597 = vpop.f32.mrb[0].mxu0
    %v598 = vadd.f32 %v447, %v597
    %599 = vmatprep.mubr.f32.mxu0 0.0
    %600 = vmatmul.mubr.f32.gmra.mrb[0].mxu0 %v125
    %v601 = vpop.f32.mrb[0].mxu0
    %v602 = vadd.f32 %v443, %v601
    %v603 = vpop.f32.mrb[0].mxu0
    %v604 = vadd.f32 %v447, %v603
    %605 = vdwg.mxu0
    %v606 = vmul.f32 %v519, 0.5
    %v607 = vmul.f32 %v521, 0.5
    %v608 = vmul.f32 %v596, 0.5
    %v609 = vmul.f32 %v598, 0.5
    %v610 = vmul.f32 %v525, 0.5
    %v611 = vmul.f32 %v527, 0.5
    %v612 = vmul.f32 %v602, 0.5
    %v613 = vmul.f32 %v604, 0.5
    %v614 = vmul.f32 %v519, 0.70710677
    %v615 = vmul.f32 %v521, 0.70710677
    %v616 = vmul.f32 %v596, 0.70710677
    %v617 = vmul.f32 %v598, 0.70710677
    %v618 = vmul.f32 %v525, 0.70710677
    %v619 = vmul.f32 %v527, 0.70710677
    %v620 = vmul.f32 %v602, 0.70710677
    %v621 = vmul.f32 %v604, 0.70710677
    %v622 = verf.f32.pop %v614
    %v623 = verf.f32.pop %v615
    %v624 = verf.f32.pop %v616
    %v625 = verf.f32.pop %v617
    %v626 = verf.f32.pop %v618
    %v627 = verf.f32.pop %v619
    %v628 = verf.f32.pop %v620
    %v629 = verf.f32.pop %v621
    %v630 = vadd.f32 %v622, 1.0
    %v631 = vadd.f32 %v623, 1.0
    %v632 = vadd.f32 %v624, 1.0
    %v633 = vadd.f32 %v625, 1.0
    %v634 = vadd.f32 %v626, 1.0
    %v635 = vadd.f32 %v627, 1.0
    %v636 = vadd.f32 %v628, 1.0
    %v637 = vadd.f32 %v629, 1.0
    %v638 = vmul.f32 %v606, %v630
    %v639 = vmul.f32 %v607, %v631
    %v640 = vmul.f32 %v608, %v632
    %v641 = vmul.f32 %v609, %v633
    %v642 = vmul.f32 %v610, %v634
    %v643 = vmul.f32 %v611, %v635
    %v644 = vmul.f32 %v612, %v636
    %v645 = vmul.f32 %v613, %v637
    %v646 = vmul.f32 %v279, %v638
    %v647 = vmul.f32 %v281, %v639
    %v648 = vmul.f32 %v356, %v640
    %v649 = vmul.f32 %v358, %v641
    %v650 = vmul.f32 %v285, %v642
    %v651 = vmul.f32 %v287, %v643
    %v652 = vmul.f32 %v362, %v644
    %v653 = vmul.f32 %v364, %v645
    %v654 = vld [vmem:[#allocation2] sm:$0xff]
    %v655 = vld [vmem:[#allocation2 + $0x8] sm:$0xff]
    %v656 = vld [vmem:[#allocation11] sm:$0xff]
    %v657 = vld [vmem:[#allocation11 + $0x8] sm:$0xff]
    %v658 = vld [vmem:[#allocation11 + $0x10] sm:$0xff]
    %v659 = vld [vmem:[#allocation11 + $0x18] sm:$0xff]
    %v660 = vld [vmem:[#allocation11 + $0x20] sm:$0xff]
    %v661 = vld [vmem:[#allocation11 + $0x28] sm:$0xff]
    %v662 = vld [vmem:[#allocation11 + $0x30] sm:$0xff]
    %v663 = vld [vmem:[#allocation11 + $0x38] sm:$0xff]
    %v664 = vld [vmem:[#allocation11 + $0x40] sm:$0xff]
    %v665 = vld [vmem:[#allocation11 + $0x48] sm:$0xff]
    %v666 = vld [vmem:[#allocation11 + $0x50] sm:$0xff]
    %v667 = vld [vmem:[#allocation11 + $0x58] sm:$0xff]
    %v668 = vld [vmem:[#allocation11 + $0x60] sm:$0xff]
    %v669 = vld [vmem:[#allocation11 + $0x68] sm:$0xff]
    %v670 = vld [vmem:[#allocation11 + $0x70] sm:$0xff]
    %v671 = vld [vmem:[#allocation11 + $0x78] sm:$0xff]
    %v672 = vld [vmem:[#allocation11 + $0x80] sm:$0xff]
    %v673 = vld [vmem:[#allocation11 + $0x88] sm:$0xff]
    %v674 = vld [vmem:[#allocation11 + $0x90] sm:$0xff]
    %v675 = vld [vmem:[#allocation11 + $0x98] sm:$0xff]
    %v676 = vld [vmem:[#allocation11 + $0xa0] sm:$0xff]
    %v677 = vld [vmem:[#allocation11 + $0xa8] sm:$0xff]
    %v678 = vld [vmem:[#allocation11 + $0xb0] sm:$0xff]
    %v679 = vld [vmem:[#allocation11 + $0xb8] sm:$0xff]
    %v680 = vld [vmem:[#allocation11 + $0xc0] sm:$0xff]
    %v681 = vld [vmem:[#allocation11 + $0xc8] sm:$0xff]
    %v682 = vld [vmem:[#allocation11 + $0xd0] sm:$0xff]
    %v683 = vld [vmem:[#allocation11 + $0xd8] sm:$0xff]
    %v684 = vld [vmem:[#allocation11 + $0xe0] sm:$0xff]
    %v685 = vld [vmem:[#allocation11 + $0xe8] sm:$0xff]
    %v686 = vld [vmem:[#allocation11 + $0xf0] sm:$0xff]
    %v687 = vld [vmem:[#allocation11 + $0xf8] sm:$0xff]
    %v688 = vld [vmem:[#allocation11 + $0x100] sm:$0xff]
    %v689 = vld [vmem:[#allocation11 + $0x108] sm:$0xff]
    %v690 = vld [vmem:[#allocation11 + $0x110] sm:$0xff]
    %v691 = vld [vmem:[#allocation11 + $0x118] sm:$0xff]
    %v692 = vld [vmem:[#allocation11 + $0x120] sm:$0xff]
    %v693 = vld [vmem:[#allocation11 + $0x128] sm:$0xff]
    %v694 = vld [vmem:[#allocation11 + $0x130] sm:$0xff]
    %v695 = vld [vmem:[#allocation11 + $0x138] sm:$0xff]
    %v696 = vld [vmem:[#allocation11 + $0x140] sm:$0xff]
    %v697 = vld [vmem:[#allocation11 + $0x148] sm:$0xff]
    %v698 = vld [vmem:[#allocation11 + $0x150] sm:$0xff]
    %v699 = vld [vmem:[#allocation11 + $0x158] sm:$0xff]
    %v700 = vld [vmem:[#allocation11 + $0x160] sm:$0xff]
    %v701 = vld [vmem:[#allocation11 + $0x168] sm:$0xff]
    %v702 = vld [vmem:[#allocation11 + $0x170] sm:$0xff]
    %v703 = vld [vmem:[#allocation11 + $0x178] sm:$0xff]
    %v704 = vld [vmem:[#allocation11 + $0x180] sm:$0xff]
    %v705 = vld [vmem:[#allocation11 + $0x188] sm:$0xff]
    %v706 = vld [vmem:[#allocation11 + $0x190] sm:$0xff]
    %v707 = vld [vmem:[#allocation11 + $0x198] sm:$0xff]
    %v708 = vld [vmem:[#allocation11 + $0x1a0] sm:$0xff]
    %v709 = vld [vmem:[#allocation11 + $0x1a8] sm:$0xff]
    %v710 = vld [vmem:[#allocation11 + $0x1b0] sm:$0xff]
    %v711 = vld [vmem:[#allocation11 + $0x1b8] sm:$0xff]
    %v712 = vld [vmem:[#allocation11 + $0x1c0] sm:$0xff]
    %v713 = vld [vmem:[#allocation11 + $0x1c8] sm:$0xff]
    %v714 = vld [vmem:[#allocation11 + $0x1d0] sm:$0xff]
    %v715 = vld [vmem:[#allocation11 + $0x1d8] sm:$0xff]
    %v716 = vld [vmem:[#allocation11 + $0x1e0] sm:$0xff]
    %v717 = vld [vmem:[#allocation11 + $0x1e8] sm:$0xff]
    %v718 = vld [vmem:[#allocation11 + $0x1f0] sm:$0xff]
    %v719 = vld [vmem:[#allocation11 + $0x1f8] sm:$0xff]
    %720 = vmatprep.subr.mxu0 0.0
    %721 = vmatpush1.msra.mxu0 %v656
    %722 = vmatprep.subr.mxu0 0.0
    %723 = vmatpush1.msra.mxu0 %v657
    %724 = vmatprep.subr.mxu0 0.0
    %725 = vmatpush1.msra.mxu0 %v658
    %726 = vmatprep.subr.mxu0 0.0
    %727 = vmatpush1.msra.mxu0 %v659
    %728 = vmatprep.subr.mxu0 0.0
    %729 = vmatpush1.msra.mxu0 %v660
    %730 = vmatprep.subr.mxu0 0.0
    %731 = vmatpush1.msra.mxu0 %v661
    %732 = vmatprep.subr.mxu0 0.0
    %733 = vmatpush1.msra.mxu0 %v662
    %734 = vmatprep.subr.mxu0 0.0
    %735 = vmatpush1.msra.mxu0 %v663
    %736 = vmatprep.subr.mxu0 0.0
    %737 = vmatpush1.msra.mxu0 %v664
    %738 = vmatprep.subr.mxu0 0.0
    %739 = vmatpush1.msra.mxu0 %v665
    %740 = vmatprep.subr.mxu0 0.0
    %741 = vmatpush1.msra.mxu0 %v666
    %742 = vmatprep.subr.mxu0 0.0
    %743 = vmatpush1.msra.mxu0 %v667
    %744 = vmatprep.subr.mxu0 0.0
    %745 = vmatpush1.msra.mxu0 %v668
    %746 = vmatprep.subr.mxu0 0.0
    %747 = vmatpush1.msra.mxu0 %v669
    %748 = vmatprep.subr.mxu0 0.0
    %749 = vmatpush1.msra.mxu0 %v670
    %750 = vmatprep.subr.mxu0 0.0
    %751 = vmatpush1.msra.mxu0 %v671
    %752 = vmatprep.subr.mxu0 0.0
    %753 = vmatpush1.msra.mxu0 %v672
    %754 = vmatprep.subr.mxu0 0.0
    %755 = vmatpush1.msra.mxu0 %v673
    %756 = vmatprep.subr.mxu0 0.0
    %757 = vmatpush1.msra.mxu0 %v674
    %758 = vmatprep.subr.mxu0 0.0
    %759 = vmatpush1.msra.mxu0 %v675
    %760 = vmatprep.subr.mxu0 0.0
    %761 = vmatpush1.msra.mxu0 %v676
    %762 = vmatprep.subr.mxu0 0.0
    %763 = vmatpush1.msra.mxu0 %v677
    %764 = vmatprep.subr.mxu0 0.0
    %765 = vmatpush1.msra.mxu0 %v678
    %766 = vmatprep.subr.mxu0 0.0
    %767 = vmatpush1.msra.mxu0 %v679
    %768 = vmatprep.subr.mxu0 0.0
    %769 = vmatpush1.msra.mxu0 %v680
    %770 = vmatprep.subr.mxu0 0.0
    %771 = vmatpush1.msra.mxu0 %v681
    %772 = vmatprep.subr.mxu0 0.0
    %773 = vmatpush1.msra.mxu0 %v682
    %774 = vmatprep.subr.mxu0 0.0
    %775 = vmatpush1.msra.mxu0 %v683
    %776 = vmatprep.subr.mxu0 0.0
    %777 = vmatpush1.msra.mxu0 %v684
    %778 = vmatprep.subr.mxu0 0.0
    %779 = vmatpush1.msra.mxu0 %v685
    %780 = vmatprep.subr.mxu0 0.0
    %781 = vmatpush1.msra.mxu0 %v686
    %782 = vmatprep.subr.mxu0 0.0
    %783 = vmatpush1.msra.mxu0 %v687
    %784 = vmatprep.mubr.f32.mxu0 %v647
    %785 = vmatmul.mubr.f32.gmra.mrb[0].mxu0 %v646
    %v786 = vpop.f32.mrb[0].mxu0
    %v787 = vadd.f32 0.0, %v786
    %v788 = vpop.f32.mrb[0].mxu0
    %789 = vmatprep.mubr.f32.mxu0 %v651
    %790 = vmatmul.mubr.f32.gmra.mrb[0].mxu0 %v650
    %v791 = vpop.f32.mrb[0].mxu0
    %v792 = vadd.f32 0.0, %v791
    %v793 = vpop.f32.mrb[0].mxu0
    %794 = vdwg.mxu0
    %795 = vmatprep.subr.mxu0 0.0
    %796 = vmatpush1.msra.mxu0 %v688
    %797 = vmatprep.subr.mxu0 0.0
    %798 = vmatpush1.msra.mxu0 %v689
    %799 = vmatprep.subr.mxu0 0.0
    %800 = vmatpush1.msra.mxu0 %v690
    %801 = vmatprep.subr.mxu0 0.0
    %802 = vmatpush1.msra.mxu0 %v691
    %803 = vmatprep.subr.mxu0 0.0
    %804 = vmatpush1.msra.mxu0 %v692
    %805 = vmatprep.subr.mxu0 0.0
    %806 = vmatpush1.msra.mxu0 %v693
    %807 = vmatprep.subr.mxu0 0.0
    %808 = vmatpush1.msra.mxu0 %v694
    %809 = vmatprep.subr.mxu0 0.0
    %810 = vmatpush1.msra.mxu0 %v695
    %811 = vmatprep.subr.mxu0 0.0
    %812 = vmatpush1.msra.mxu0 %v696
    %813 = vmatprep.subr.mxu0 0.0
    %814 = vmatpush1.msra.mxu0 %v697
    %815 = vmatprep.subr.mxu0 0.0
    %816 = vmatpush1.msra.mxu0 %v698
    %817 = vmatprep.subr.mxu0 0.0
    %818 = vmatpush1.msra.mxu0 %v699
    %819 = vmatprep.subr.mxu0 0.0
    %820 = vmatpush1.msra.mxu0 %v700
    %821 = vmatprep.subr.mxu0 0.0
    %822 = vmatpush1.msra.mxu0 %v701
    %823 = vmatprep.subr.mxu0 0.0
    %824 = vmatpush1.msra.mxu0 %v702
    %825 = vmatprep.subr.mxu0 0.0
    %826 = vmatpush1.msra.mxu0 %v703
    %827 = vmatprep.subr.mxu0 0.0
    %828 = vmatpush1.msra.mxu0 %v704
    %829 = vmatprep.subr.mxu0 0.0
    %830 = vmatpush1.msra.mxu0 %v705
    %831 = vmatprep.subr.mxu0 0.0
    %832 = vmatpush1.msra.mxu0 %v706
    %833 = vmatprep.subr.mxu0 0.0
    %834 = vmatpush1.msra.mxu0 %v707
    %835 = vmatprep.subr.mxu0 0.0
    %836 = vmatpush1.msra.mxu0 %v708
    %837 = vmatprep.subr.mxu0 0.0
    %838 = vmatpush1.msra.mxu0 %v709
    %839 = vmatprep.subr.mxu0 0.0
    %840 = vmatpush1.msra.mxu0 %v710
    %841 = vmatprep.subr.mxu0 0.0
    %842 = vmatpush1.msra.mxu0 %v711
    %843 = vmatprep.subr.mxu0 0.0
    %844 = vmatpush1.msra.mxu0 %v712
    %845 = vmatprep.subr.mxu0 0.0
    %846 = vmatpush1.msra.mxu0 %v713
    %847 = vmatprep.subr.mxu0 0.0
    %848 = vmatpush1.msra.mxu0 %v714
    %849 = vmatprep.subr.mxu0 0.0
    %850 = vmatpush1.msra.mxu0 %v715
    %851 = vmatprep.subr.mxu0 0.0
    %852 = vmatpush1.msra.mxu0 %v716
    %853 = vmatprep.subr.mxu0 0.0
    %854 = vmatpush1.msra.mxu0 %v717
    %855 = vmatprep.subr.mxu0 0.0
    %856 = vmatpush1.msra.mxu0 %v718
    %857 = vmatprep.subr.mxu0 0.0
    %858 = vmatpush1.msra.mxu0 %v719
    %859 = vmatprep.mubr.f32.mxu0 %v649
    %860 = vmatmul.mubr.f32.gmra.mrb[0].mxu0 %v648
    %v861 = vpop.f32.mrb[0].mxu0
    %v862 = vadd.f32 %v787, %v861
    %v863 = vpop.f32.mrb[0].mxu0
    %864 = vmatprep.mubr.f32.mxu0 %v653
    %865 = vmatmul.mubr.f32.gmra.mrb[0].mxu0 %v652
    %v866 = vpop.f32.mrb[0].mxu0
    %v867 = vadd.f32 %v792, %v866
    %v868 = vpop.f32.mrb[0].mxu0
    %869 = vdwg.mxu0
    %v870 = vadd.f32 %v654, %v862
    %v871 = vadd.f32 %v655, %v867
    %872 = vst [vmem:[#allocation2] sm:$0xff] %v870
    %873 = vst [vmem:[#allocation2 + $0x8] sm:$0xff] %v871
    // Predicated region
    $region54: #{tpu_custom_call.1} parent=1 // pred_check
      %p874 = pneg %p118
    $region55: #{tpu_custom_call.1} parent=1 // pred_check_branch
      %876 = sbr.rel (%p874) target = $region57
    $region56: #{tpu_custom_call.1} parent=1 // pred_region
      %v877 = vld [vmem:[#allocation2] sm:$0xff]
      %v878 = vld [vmem:[#allocation2 + $0x8] sm:$0xff]
      %v879 = vld [vmem:[%s6] sm:$0x1]
      %v881 = vlaneseq
      %v882 = vshrl.u32 %v881, 7
      %v883 = vsub.s32 0, %v882
      %v884 = vrot.slane %v879, %v883
      %v886 = vadd.f32 %v877, %v884
      %v887 = vadd.f32 %v878, %v884
      %888 = vst [vmem:[#allocation12] sm:$0xff] %v886
      %889 = vst [vmem:[#allocation12 + $0x8] sm:$0xff] %v887
    $region57: #{tpu_custom_call.1} parent=1 // pred_fallthru
      _
    // Predicated region
    $region58: #{tpu_custom_call.1} parent=1 // pred_check
      _
    $region59: #{tpu_custom_call.1} parent=1 // pred_check_branch
      %891 = sbr.rel (0) target = $region61
    $region60: #{tpu_custom_call.1} parent=1 // pred_region
      %s893 = ssub.s32 256, 256
      %894 = vsyncadd [#allocation5], %s893
      %s895 = sshll.u32 [#allocation12], 4
      %s896 = int_to_ptr.vmem [resolvable:$true] %s895
      %901 = dma.vmem_to_hbm [thread:$0]  %s896, 256, %s7, [#allocation5], 128, 128, 8
    $region61: #{tpu_custom_call.1} parent=1 // pred_fallthru
      _
    // Predicated region
    $region62: #{tpu_custom_call.1} parent=1 // pred_check
      _
    $region63: #{tpu_custom_call.1} parent=1 // pred_check_branch
      %903 = sbr.rel (0) target = $region65
    $region64: #{tpu_custom_call.1} parent=1 // pred_region
      %904 = dma.done [#allocation5], 256
    $region65: #{tpu_custom_call.1} parent=1 // pred_fallthru
      _
    %905 = vsyncpa [#allocation4], 1
    %906 = vsyncpa [#allocation7], 1
    %907 = vsyncpa [#allocation10], 1
    %908 = vsyncpa [#allocation5], 1

</llo_original>
